<compile_context>
chip_gen: v5e
topology: v5e:2x2
jax: 0.10.0
libtpu: 0.0.40
codegen_flags: <defaults>
</compile_context>

<pallas_src>
import functools

import jax
import jax.numpy as jnp
from jax.experimental import pallas as pl
from jax.experimental.pallas import tpu as pltpu

LANES = 128
_MIB = 1024 * 1024


# ---------------------------------------------------------------------------
# Pallas kernel: elementwise clamp(x + half_alpha, 0, alpha) on one VMEM tile.
# half_alpha / alpha are Python floats closed over (learnable=False path);
# weak typing keeps the computation in x's dtype.
# ---------------------------------------------------------------------------
def _inv_rectangle_kernel(x_ref, o_ref, *, half_alpha, alpha):
    x = x_ref[...]
    o_ref[...] = jnp.minimum(jnp.maximum(x + half_alpha, 0.0), alpha)


def _round_up(a, b):
    return (a + b - 1) // b * b


def _vmem_capacity_bytes() -> int:
    """Trace-time VMEM query; conservative (v7x) fallback if unavailable."""
    try:
        return int(pltpu.get_tpu_info().vmem_capacity_bytes)
    except Exception:
        return 64 * _MIB


def _clip_ref(x, alpha):
    """Pure-JAX reference / fallback: fused XLA clip at HBM roofline."""
    return jnp.clip(x + 0.5 * alpha, 0.0, 1.0 * alpha)


def inv_rectangle(x: jax.Array, alpha: float = 1.0, *,
                  min_pallas_bytes: int = 1 * _MIB) -> jax.Array:
    """JAX/Pallas equivalent of InvRectangle.forward (inference path)."""
    dtype = x.dtype
    n = x.size
    itemsize = jnp.dtype(dtype).itemsize

    # Fallbacks where a standalone Pallas dispatch loses to XLA's fused clip:
    #   * tiny tensors (fixed dispatch + single grid step dominates, and the
    #     bypass lets XLA fuse the clamp into adjacent ops),
    #   * ragged sizes (avoids the old 3x-traffic pad + slice round-trip),
    #   * non-float dtypes (the float-constant add promotes, like the reference).
    if (not jnp.issubdtype(dtype, jnp.floating)
            or n == 0
            or n % LANES != 0
            or n * itemsize < min_pallas_bytes):
        return _clip_ref(x, alpha)

    # dtype-correct sublane multiple: 8 for 32-bit, 16 for bf16, 32 for 8-bit.
    sublane_mult = max(8, 8 * (4 // itemsize))

    x2d = x.reshape(-1, LANES)  # free metadata op in the aligned path
    rows = x2d.shape[0]

    # Generation-aware block size: ~VMEM/8 per block so double-buffered
    # in+out (4x block) stays at ~VMEM/2 with headroom on every chip.
    #   v7x  (64 MiB VMEM)  ->  8 MiB blocks
    #   v5e/v6e (128 MiB)   -> 16 MiB blocks
    vmem_cap = _vmem_capacity_bytes()
    target_block_bytes = max(1 * _MIB, vmem_cap // 8)

    tile_rows = max(sublane_mult, target_block_bytes // (LANES * itemsize))
    tile_rows = _round_up(tile_rows, sublane_mult)

    # Guarantee >= 2 grid blocks so the "parallel" axis can actually be split
    # across v7x's 2 TensorCores even for mid-sized (~1-8 MiB) activations.
    if rows > sublane_mult:
        half_rows = _round_up(-(-rows // 2), sublane_mult)
        tile_rows = min(tile_rows, half_rows)
    else:
        tile_rows = min(tile_rows, _round_up(rows, sublane_mult))

    grid = (pl.cdiv(rows, tile_rows),)  # ragged last block handled by Pallas

    # vmem limit: 3/4 of physical, capped at 80 MiB (-> 48 MiB on v7x,
    # 80 MiB on v5e/v6e; lifts v5e's 16 MiB scoped default).
    vmem_limit = int(min(vmem_cap * 3 // 4, 80 * _MIB))

    kernel = functools.partial(
        _inv_rectangle_kernel,
        half_alpha=float(0.5 * alpha),
        alpha=float(alpha),
    )

    cost = pl.CostEstimate(
        flops=3 * n,                       # add + max + min per element
        transcendentals=0,
        bytes_accessed=2 * n * itemsize,   # one read + one write
    )

    out2d = pl.pallas_call(
        kernel,
        out_shape=jax.ShapeDtypeStruct((rows, LANES), dtype),
        grid=grid,
        in_specs=[pl.BlockSpec((tile_rows, LANES), lambda i: (i, 0))],
        out_specs=pl.BlockSpec((tile_rows, LANES), lambda i: (i, 0)),
        input_output_aliases={0: 0},       # output may reuse the input buffer
        cost_estimate=cost,
        compiler_params=pltpu.CompilerParams(
            dimension_semantics=("parallel",),  # megacore sharding on v7x
            vmem_limit_bytes=vmem_limit,
        ),
    )(x2d)

    return out2d.reshape(x.shape)


if __name__ == "__main__":
    key = jax.random.PRNGKey(0)
    k1, k2 = jax.random.split(key)
    alpha = 1.0  # InvRectangle default; learnable=False path.
    # TODO(synk): learnable=True path (nn.Parameter promotion of alpha) is a
    # training-time side effect with no kernel-level equivalent; alpha is a
    # compile-time constant here.

    # Small NCHW input consistent with the module usage.
    x_small = jax.random.normal(k1, (2, 4, 16, 16), dtype=jnp.float32)

    # Default path: small-input bypass (fused XLA clip).
    y_small = jax.block_until_ready(inv_rectangle(x_small, alpha))
    assert y_small.shape == x_small.shape and y_small.dtype == x_small.dtype
    assert jnp.allclose(y_small, _clip_ref(x_small, alpha), atol=1e-6, rtol=1e-6)

    # Force the Pallas path on the same small input (exercises the kernel,
    # 2-block grid: rows=16, tile_rows=8).
    y_small_pl = jax.block_until_ready(
        inv_rectangle(x_small, alpha, min_pallas_bytes=0))
    assert y_small_pl.shape == x_small.shape and y_small_pl.dtype == x_small.dtype
    assert jnp.allclose(y_small_pl, _clip_ref(x_small, alpha), atol=1e-6, rtol=1e-6)

    # Slightly larger aligned input: exercises the multi-block parallel grid.
    x_big = jax.random.normal(k2, (2, 4, 64, 64), dtype=jnp.float32)
    y_big = jax.block_until_ready(
        inv_rectangle(x_big, alpha, min_pallas_bytes=0))
    assert y_big.shape == x_big.shape and y_big.dtype == x_big.dtype
    assert jnp.allclose(y_big, _clip_ref(x_big, alpha), atol=1e-6, rtol=1e-6)

    print("KERNEL_OK")
</pallas_src>

<mosaic_0001>
module attributes {stable_mosaic.version = 11 : i64} {
  func.func @_inv_rectangle_kernel(%arg0: i32, %arg1: memref<8x128xf32, #tpu.memory_space<vmem>>, %arg2: memref<8x128xf32, #tpu.memory_space<vmem>>) attributes {dimension_semantics = [#tpu.dimension_semantics<parallel>], iteration_bounds = array<i64: 2>, scalar_prefetch = 0 : i64, scratch_operands = 0 : i64, tpu.core_type = #tpu.core_type<tc>, window_params = [{transform_indices = @transform_0, window_bounds = array<i64: 8, 128>}, {transform_indices = @transform_1, window_bounds = array<i64: 8, 128>}]} {
    %c0 = arith.constant 0 : index
    %c0_0 = arith.constant 0 : index
    %0 = vector.load %arg1[%c0, %c0_0] : memref<8x128xf32, #tpu.memory_space<vmem>>, vector<8x128xf32>
    %cst = arith.constant 5.000000e-01 : f32
    %1 = vector.broadcast %cst : f32 to vector<8x128xf32>
    %2 = arith.addf %0, %1 : vector<8x128xf32>
    %cst_1 = arith.constant 0.000000e+00 : f32
    %3 = vector.broadcast %cst_1 : f32 to vector<8x128xf32>
    %4 = arith.maximumf %2, %3 : vector<8x128xf32>
    %cst_2 = arith.constant 1.000000e+00 : f32
    %5 = vector.broadcast %cst_2 : f32 to vector<8x128xf32>
    %6 = arith.minimumf %4, %5 : vector<8x128xf32>
    %c0_3 = arith.constant 0 : index
    %c0_4 = arith.constant 0 : index
    %7 = vector.load %arg2[%c0_3, %c0_4] : memref<8x128xf32, #tpu.memory_space<vmem>>, vector<8x128xf32>
    tpu.vector_store %arg2[%c0_3, %c0_4], %6 {strides = array<i32>} : memref<8x128xf32, #tpu.memory_space<vmem>>, vector<8x128xf32>,
    return
  }
  func.func @transform_0(%arg0: i32) -> (i32, i32) {
    %c0_i32 = arith.constant 0 : i32
    %c0_i32_0 = arith.constant 0 : i32
    return %arg0, %c0_i32 : i32, i32
  }
  func.func @transform_1(%arg0: i32) -> (i32, i32) {
    %c0_i32 = arith.constant 0 : i32
    %c0_i32_0 = arith.constant 0 : i32
    return %arg0, %c0_i32 : i32, i32
  }
}

</mosaic_0001>

<llo_original>
// kernel: tpu_custom_call.1
$region0: #{tpu_custom_call.1}
  #allocation0 [shape = 'u32[]', space=smem, size = 0x4, offset = 0x4, fixed_abs, tag = 'smem constant byte address 0x4 - core index']
  #allocation1 [shape = 'u32[72,128]{1,0:T(1,128)}', space=vmem, size = 0x9000, scoped, tag = 'internal scratch']
  %s0 = inlined_call_operand.hbm [shape: f32[16,128], index: 0, kind: input, shape index: {}, may-alias: {0,1}]
  %s1 = inlined_call_operand.hbm [shape: f32[16,128], index: 1, kind: output, shape index: {}, may-alias: {0,1}]
  %s2 = sld [smem:[#allocation0]]
  $region41: #{tpu_custom_call.1} parent=0
    _
  %s4 = ssub.s32 1, %s2
  %s5 = scalar_select 0, %s4, %s2
  $region1: #{tpu_custom_call.1} parent=0
    #allocation2 [shape = 'u8[8192]{0}', space=vmem, size = 0x2000, scoped, tag = 'input window, operand 0']
    #allocation3 [shape = 's32[2]{0}', space=sflag, size = 0x8, scoped, tag = 'scoped memory for tpu_custom_call.1']
    #allocation4 [shape = 's32[2]{0}', space=sflag, size = 0x8, scoped, tag = 'scoped memory for tpu_custom_call.1']
    #allocation5 [shape = 'u8[8192]{0}', space=vmem, size = 0x2000, scoped, tag = 'output window, operand 0']
    %6 = vsyncpa [#allocation3], 0
    %s7 = scalar_lea.sflag [#allocation3], 1
    %8 = vsyncpa %s7, 0
    %9 = vsyncpa [#allocation4], 0
    %s10 = scalar_lea.sflag [#allocation4], 1
    %11 = vsyncpa %s10, 0
    loop: start=0, step=1, limit=4
    $region2: #{tpu_custom_call.1} parent=1 // loop_pre_header
      _
    $region3: #{tpu_custom_call.1} parent=1 // loop_header
      %s13 = sphi 0, %s17
      %p14 = scmp.ge.s32.totalorder %s13, 4
      %s23 = sphi 0, %s25
      %s26 = sphi 0, %s23
      %s27 = sphi 0, %s26
      %s43 = sphi 0, %s27
      %s49 = sphi 0, %s51
      %s52 = sphi 0, %s49
      %s53 = sphi 0, %s52
      %s69 = sphi 0, %s53
    $region4: #{tpu_custom_call.1} parent=1 // loop_header_branch
      %16 = sbr.rel (%p14) target = $region8
    $region5: #{tpu_custom_call.1} parent=1 // loop_body
      %s18 = ssub.s32 %s13, 1
      %s19 = ssub.s32 %s13, 2
      %s20 = sadd.s32 %s13, 1
      %s21 = ssub.s32 %s13, %s20
      %p22 = scmp.eq.s32.totalorder %s21, 0
      %s24 = sadd.s32 %s23, 1
      %s25 = scalar_select %p22, %s23, %s24
      %p28 = pneg %p22
      %p29 = scmp.eq.s32.totalorder %s13, 1
      %p30 = por %p28, %p29
      %p31 = scmp.ne.s32.totalorder %s23, %s26
      %p32 = scmp.eq.s32.totalorder %s13, 0
      %p33 = por %p31, %p32
      %p34 = scmp.ne.s32.totalorder %s23, %s26
      %p35 = scmp.eq.s32.totalorder %s18, 1
      %p36 = por %p34, %p35
      %p37 = scmp.ne.s32.totalorder %s26, %s27
      %p38 = scmp.eq.s32.totalorder %s18, 0
      %p39 = por %p37, %p38
      %p40 = scmp.ne.s32.totalorder %s26, %s27
      %p41 = scmp.eq.s32.totalorder %s19, 1
      %p42 = por %p40, %p41
      %p44 = scmp.ne.s32.totalorder %s27, %s43
      %p45 = scmp.eq.s32.totalorder %s19, 0
      %p46 = por %p44, %p45
      %s47 = ssub.s32 %s13, %s20
      %p48 = scmp.eq.s32.totalorder %s47, 0
      %s50 = sadd.s32 %s49, 1
      %s51 = scalar_select %p48, %s49, %s50
      %p54 = pneg %p48
      %p55 = scmp.eq.s32.totalorder %s13, 1
      %p56 = por %p54, %p55
      %p57 = scmp.ne.s32.totalorder %s49, %s52
      %p58 = scmp.eq.s32.totalorder %s13, 0
      %p59 = por %p57, %p58
      %p60 = scmp.ne.s32.totalorder %s49, %s52
      %p61 = scmp.eq.s32.totalorder %s18, 1
      %p62 = por %p60, %p61
      %p63 = scmp.ne.s32.totalorder %s52, %s53
      %p64 = scmp.eq.s32.totalorder %s18, 0
      %p65 = por %p63, %p64
      %p66 = scmp.ne.s32.totalorder %s52, %s53
      %p67 = scmp.eq.s32.totalorder %s19, 1
      %p68 = por %p66, %p67
      %p70 = scmp.ne.s32.totalorder %s53, %s69
      %p71 = scmp.eq.s32.totalorder %s19, 0
      %p72 = por %p70, %p71
      %p73 = scmp.le.s32.totalorder 1, %s13
      %p74 = scmp.lt.s32.totalorder %s13, 3
      %p75 = pnand %p73, %p74
      %p76 = pneg %p75
      // Predicated region
      $region9: #{tpu_custom_call.1} parent=5 // pred_check
        _
      $region10: #{tpu_custom_call.1} parent=5 // pred_check_branch
        %78 = sbr.rel (%p75) target = $region12
      $region11: #{tpu_custom_call.1} parent=5 // pred_region
        %s79 = ssub.s32 %s13, 1
      $region12: #{tpu_custom_call.1} parent=5 // pred_fallthru
        _
      %p80 = scmp.lt.s32.totalorder %s13, 2
      // Predicated region
      $region13: #{tpu_custom_call.1} parent=5 // pred_check
        %p81 = pneg %p80
      $region14: #{tpu_custom_call.1} parent=5 // pred_check_branch
        %83 = sbr.rel (%p81) target = $region16
      $region15: #{tpu_custom_call.1} parent=5 // pred_region
        // Predicated region
        $region17: #{tpu_custom_call.1} parent=15 // pred_check
          %p84 = pneg %p33
        $region18: #{tpu_custom_call.1} parent=15 // pred_check_branch
          %86 = sbr.rel (%p84) target = $region20
        $region19: #{tpu_custom_call.1} parent=15 // pred_region
          %s87 = sand.u32 %s23, 1
          %s88 = scalar_lea.sflag [#allocation3], %s87
          %s89 = sand.u32 %s23, 1
          %s90 = smul.addr %s89, 8
          %s91 = scalar_lea.vmem [#allocation2], %s90
          %93 = vsyncadd %s88, 0
          %s94 = smul.addr %s13, 8
          %s95 = scalar_lea.hbm %s0, %s94
          %s97 = sshll.u32 %s95, 4
          %s98 = int_to_ptr.hbm [resolvable:$true] %s97
          %s99 = sshll.u32 %s91, 4
          %s100 = int_to_ptr.vmem [resolvable:$true] %s99
          %102 = dma.hbm_to_vmem [thread:$0]  %s98, 128, %s100, %s88
        $region20: #{tpu_custom_call.1} parent=15 // pred_fallthru
          _
      $region16: #{tpu_custom_call.1} parent=5 // pred_fallthru
        _
      %p103 = scmp.le.s32.totalorder 1, %s13
      %p104 = scmp.lt.s32.totalorder %s13, 3
      %p105 = pnand %p103, %p104
      %p106 = pneg %p105
      // Predicated region
      $region21: #{tpu_custom_call.1} parent=5 // pred_check
        _
      $region22: #{tpu_custom_call.1} parent=5 // pred_check_branch
        %108 = sbr.rel (%p105) target = $region24
      $region23: #{tpu_custom_call.1} parent=5 // pred_region
        %s109 = ssub.s32 %s13, 1
        %s110 = sand.u32 %s26, 1
        %s111 = scalar_lea.sflag [#allocation3], %s110
        %s112 = sand.u32 %s26, 1
        %s113 = smul.addr %s112, 8
        %s114 = scalar_lea.vmem [#allocation2], %s113
        // Predicated region
        $region25: #{tpu_custom_call.1} parent=23 // pred_check
          %p115 = pneg %p39
        $region26: #{tpu_custom_call.1} parent=23 // pred_check_branch
          %117 = sbr.rel (%p115) target = $region28
        $region27: #{tpu_custom_call.1} parent=23 // pred_region
          %119 = dma.done %s111, 128
        $region28: #{tpu_custom_call.1} parent=23 // pred_fallthru
          _
        %s120 = sand.u32 %s26, 1
        %s121 = scalar_lea.sflag [#allocation3], %s120
        %s122 = sand.u32 %s26, 1
        %s123 = smul.addr %s122, 8
        %s124 = scalar_lea.vmem [#allocation2], %s123
        %p125 = pneg %p39
        %p126 = pneg %p36
        %p127 = pneg %p65
        %p128 = pneg %p62
        %s129 = sand.u32 %s52, 1
        %s130 = scalar_lea.sflag [#allocation4], %s129
        %s131 = sand.u32 %s52, 1
        %s132 = smul.addr %s131, 8
        %s133 = scalar_lea.vmem [#allocation5], %s132
        %v134 = vld [vmem:[%s114] sm:$0xff]
        %v135 = vadd.f32 %v134, 0.5
        %v136 = vmax.f32 %v135, 0.0
        %v137 = vmin.f32 %v136, 1.0
        %138 = vst [vmem:[%s133] sm:$0xff] %v137
        %s139 = sand.u32 %s52, 1
        %s140 = scalar_lea.sflag [#allocation4], %s139
        %s141 = sand.u32 %s52, 1
        %s142 = smul.addr %s141, 8
        %s143 = scalar_lea.vmem [#allocation5], %s142
        // Predicated region
        $region29: #{tpu_custom_call.1} parent=23 // pred_check
          %p144 = pneg %p62
        $region30: #{tpu_custom_call.1} parent=23 // pred_check_branch
          %146 = sbr.rel (%p144) target = $region32
        $region31: #{tpu_custom_call.1} parent=23 // pred_region
          %148 = vsyncadd %s140, 0
          %s149 = smul.addr %s18, 8
          %s150 = scalar_lea.hbm %s1, %s149
          %s152 = sshll.u32 %s143, 4
          %s153 = int_to_ptr.vmem [resolvable:$true] %s152
          %s154 = sshll.u32 %s150, 4
          %s155 = int_to_ptr.hbm [resolvable:$true] %s154
          %157 = dma.vmem_to_hbm [thread:$0]  %s153, 128, %s155, %s140
        $region32: #{tpu_custom_call.1} parent=23 // pred_fallthru
          _
      $region24: #{tpu_custom_call.1} parent=5 // pred_fallthru
        _
      %p158 = scmp.le.s32.totalorder 2, %s13
      // Predicated region
      $region33: #{tpu_custom_call.1} parent=5 // pred_check
        %p159 = pneg %p158
      $region34: #{tpu_custom_call.1} parent=5 // pred_check_branch
        %161 = sbr.rel (%p159) target = $region36
      $region35: #{tpu_custom_call.1} parent=5 // pred_region
        %s162 = ssub.s32 %s13, 2
        // Predicated region
        $region37: #{tpu_custom_call.1} parent=35 // pred_check
          %p163 = pneg %p68
        $region38: #{tpu_custom_call.1} parent=35 // pred_check_branch
          %165 = sbr.rel (%p163) target = $region40
        $region39: #{tpu_custom_call.1} parent=35 // pred_region
          %s166 = sand.u32 %s53, 1
          %s167 = scalar_lea.sflag [#allocation4], %s166
          %s168 = sand.u32 %s53, 1
          %s169 = smul.addr %s168, 8
          %s170 = scalar_lea.vmem [#allocation5], %s169
          %172 = dma.done %s167, 128
        $region40: #{tpu_custom_call.1} parent=35 // pred_fallthru
          _
      $region36: #{tpu_custom_call.1} parent=5 // pred_fallthru
        _
    $region6: #{tpu_custom_call.1} parent=1 // loop_footer
      %s17 = sadd.s32 1, %s13
    $region7: #{tpu_custom_call.1} parent=1 // loop_footer_branch
      %12 = sbr.rel target = $region3
    $region8: #{tpu_custom_call.1} parent=1 // loop_exit
      _
    %173 = vsyncpa [#allocation3], 1
    %s174 = scalar_lea.sflag [#allocation3], 1
    %175 = vsyncpa %s174, 1
    %176 = vsyncpa [#allocation4], 1
    %s177 = scalar_lea.sflag [#allocation4], 1
    %178 = vsyncpa %s177, 1

</llo_original>
